<compile_context>
chip_gen: v6e
topology: v6e:2x2x1
jax: 0.10.0
libtpu: 0.0.40
codegen_flags: <defaults>
</compile_context>

<pallas_src>
from functools import partial

import jax
import jax.numpy as jnp
from jax.experimental import pallas as pl
from jax.experimental.pallas import tpu as pltpu


def _round_up(x, m):
    return ((x + m - 1) // m) * m


def _ce_kernel(hw, logits_ref, targets_ref, out_ref):
    j = pl.program_id(1)

    x = logits_ref[...]                      # (C, T) native dtype (bf16 stays bf16)
    t = targets_ref[...]                     # (1, T) int32
    T = x.shape[1]

    # --- native-dtype passes: max and one-hot select are exact in bf16 ---
    x_max = jnp.max(x, axis=0, keepdims=True).astype(jnp.float32)           # (1, T)
    class_ids = jax.lax.broadcasted_iota(jnp.int32, x.shape, 0)             # (C, T)
    tgt_logit = jnp.sum(
        jnp.where(class_ids == t, x, jnp.zeros((), x.dtype)),
        axis=0, keepdims=True).astype(jnp.float32)                          # (1, T)

    # --- f32 for the numerically sensitive part (exp / sum / log) ---
    xf = x.astype(jnp.float32)
    lse = jnp.log(jnp.sum(jnp.exp(xf - x_max), axis=0, keepdims=True)) + x_max
    loss = lse - tgt_logit                                                  # (1, T)

    base_mask = t >= 0                                                      # (1, T)

    # output block is the per-image accumulator (constant block index over j)
    @pl.when(j == 0)
    def _():
        out_ref[...] = jnp.zeros_like(out_ref)

    def _acc(mask):
        out_ref[0:1, :] += jnp.where(mask, loss, 0.0)
        out_ref[1:2, :] += mask.astype(jnp.float32)

    if hw % T == 0:
        # no ragged tail for this tiling -> skip iota/compare entirely
        _acc(base_mask)
    else:
        last_j = pl.num_programs(1) - 1

        @pl.when(j != last_j)
        def _():
            _acc(base_mask)

        @pl.when(j == last_j)
        def _():
            pix = j * T + jax.lax.broadcasted_iota(jnp.int32, (1, T), 1)
            _acc(jnp.logical_and(base_mask, pix < hw))


def cross_entropy_loss_2d(outputs, targets, *, target_block_bytes=2 << 20):
    """outputs: (N, C, H, W) float logits; targets: (N, H, W) int class ids.

    Returns sum(per-pixel CE where targets >= 0) / count(targets >= 0).
    (If every target is masked this is 0/0 -> NaN, matching PyTorch's mean.)
    """
    N, C, H, W = outputs.shape
    HW = H * W

    # Free reshapes only: no transpose, no pad, no wrapper-side dtype cast.
    logits = outputs.reshape(N, C, HW)
    tgt = targets.reshape(N, 1, HW).astype(jnp.int32)

    itemsize = jnp.dtype(logits.dtype).itemsize

    # ---- byte-based tile sizing: ~target_block_bytes of logits per block so
    # per-step overhead / DMA latency amortize even for small C, clamped to
    # the image extent and kept lane-dense (multiple of 128). ----
    hw_cap = max(128, _round_up(HW, 128))
    tile = max(2048, target_block_bytes // max(1, C * itemsize))
    tile = min(tile, hw_cap)
    tile = max(128, (tile // 128) * 128)

    # ---- per-generation VMEM budget, passed explicitly to the compiler ----
    try:
        vmem_cap = int(pltpu.get_tpu_info().vmem_capacity_bytes)
    except Exception:
        vmem_cap = 64 << 20            # conservative (v7x per-TensorCore)
    budget = min(int(vmem_cap * 0.6), 48 << 20)

    def _vmem_bytes(t):
        in_b = 2 * (C * t * itemsize + t * 4)   # double-buffered logits + targets
        out_b = 2 * (2 * t * 4)                 # resident (2, tile) output block
        tmp_b = 3 * C * t * 4 + 8 * t * 4       # f32 temporaries + (1, t) vectors
        return in_b + out_b + tmp_b

    while tile > 128 and _vmem_bytes(tile) > budget:
        tile = max(128, ((tile // 2) // 128) * 128)

    nb = pl.cdiv(HW, tile)
    grid = (N, nb)

    out = pl.pallas_call(
        partial(_ce_kernel, HW),
        out_shape=jax.ShapeDtypeStruct((N, 2, tile), jnp.float32),
        grid_spec=pltpu.PrefetchScalarGridSpec(
            num_scalar_prefetch=0,
            grid=grid,
            in_specs=[
                pl.BlockSpec((None, C, tile), lambda n, j: (n, 0, j)),
                pl.BlockSpec((None, 1, tile), lambda n, j: (n, 0, j)),
            ],
            # per-image accumulator: block index constant over j (reduction)
            out_specs=pl.BlockSpec((None, 2, tile), lambda n, j: (n, 0, 0)),
        ),
        compiler_params=pltpu.CompilerParams(
            dimension_semantics=("parallel", "arbitrary"),
            vmem_limit_bytes=int(budget),
        ),
    )(logits, tgt)

    loss_sum = jnp.sum(out[:, 0, :])
    count = jnp.sum(out[:, 1, :])
    return loss_sum / count


def _reference(outputs, targets):
    # pure-JAX reference mirroring nn.CrossEntropyLoss(reduce=False) + masked mean
    logp = jax.nn.log_softmax(outputs.astype(jnp.float32), axis=1)   # (N, C, H, W)
    t = targets.astype(jnp.int32)
    nll = -jnp.take_along_axis(logp, jnp.clip(t, 0, None)[:, None], axis=1)[:, 0]
    mask = t >= 0
    return jnp.sum(jnp.where(mask, nll, 0.0)) / jnp.sum(mask.astype(jnp.float32))


if __name__ == "__main__":
    key = jax.random.PRNGKey(0)
    k1, k2, k3 = jax.random.split(key, 3)

    N, C, H, W = 2, 4, 16, 16
    outputs = jax.random.normal(k1, (N, C, H, W), dtype=jnp.float32)
    targets = jax.random.randint(k2, (N, H, W), 0, C, dtype=jnp.int32)
    # mask out ~10% of pixels (targets < 0) to exercise the masked mean
    drop = jax.random.uniform(k3, (N, H, W)) < 0.1
    targets = jnp.where(drop, -1, targets)

    loss = cross_entropy_loss_2d(outputs, targets)
    loss = jax.block_until_ready(loss)

    ref = _reference(outputs, targets)
    assert jnp.allclose(loss, ref, rtol=1e-5, atol=1e-5), (loss, ref)

    print("KERNEL_OK")
</pallas_src>

<mosaic_0001>
module attributes {stable_mosaic.version = 11 : i64} {
  func.func @_ce_kernel(%arg0: i32, %arg1: i32, %arg2: memref<1x4x256xf32, #tpu.memory_space<vmem>>, %arg3: memref<1x1x256xi32, #tpu.memory_space<vmem>>, %arg4: memref<1x2x256xf32, #tpu.memory_space<vmem>>) attributes {dimension_semantics = [#tpu.dimension_semantics<parallel>, #tpu.dimension_semantics<arbitrary>], iteration_bounds = array<i64: 2, 1>, scalar_prefetch = 0 : i64, scratch_operands = 0 : i64, tpu.core_type = #tpu.core_type<tc>, window_params = [{transform_indices = @transform_0, window_bounds = array<i64: 1, 4, 256>}, {transform_indices = @transform_1, window_bounds = array<i64: 1, 1, 256>}, {transform_indices = @transform_2, window_bounds = array<i64: 1, 2, 256>}]} {
    %c0 = arith.constant 0 : index
    %c0_0 = arith.constant 0 : index
    %c0_1 = arith.constant 0 : index
    %0 = vector.load %arg2[%c0, %c0_0, %c0_1] : memref<1x4x256xf32, #tpu.memory_space<vmem>>, vector<1x4x256xf32>
    %1 = vector.shape_cast %0 : vector<1x4x256xf32> to vector<4x256xf32>
    %c0_2 = arith.constant 0 : index
    %c0_3 = arith.constant 0 : index
    %c0_4 = arith.constant 0 : index
    %2 = vector.load %arg3[%c0_2, %c0_3, %c0_4] : memref<1x1x256xi32, #tpu.memory_space<vmem>>, vector<1x1x256xi32>
    %3 = vector.shape_cast %2 : vector<1x1x256xi32> to vector<1x256xi32>
    %cst = arith.constant dense<0xFF800000> : vector<256xf32>
    %4 = vector.multi_reduction <maximumf>, %1, %cst [0] : vector<4x256xf32> to vector<256xf32>
    %5 = vector.shape_cast %4 : vector<256xf32> to vector<1x256xf32>
    %6 = tpu.iota {dimensions = array<i32: 0>} : vector<4x256xi32>
    %7 = vector.broadcast %3 : vector<1x256xi32> to vector<4x256xi32>
    %8 = arith.cmpi eq, %6, %7 : vector<4x256xi32>
    %cst_5 = arith.constant 0.000000e+00 : f32
    %9 = vector.broadcast %cst_5 : f32 to vector<4x256xf32>
    %10 = arith.select %8, %1, %9 : vector<4x256xi1>, vector<4x256xf32>
    %cst_6 = arith.constant dense<0.000000e+00> : vector<256xf32>
    %11 = vector.multi_reduction <add>, %10, %cst_6 [0] : vector<4x256xf32> to vector<256xf32>
    %12 = vector.shape_cast %11 : vector<256xf32> to vector<1x256xf32>
    %13 = vector.broadcast %5 : vector<1x256xf32> to vector<4x256xf32>
    %14 = arith.subf %1, %13 : vector<4x256xf32>
    %15 = math.exp %14 : vector<4x256xf32>
    %cst_7 = arith.constant dense<0.000000e+00> : vector<256xf32>
    %16 = vector.multi_reduction <add>, %15, %cst_7 [0] : vector<4x256xf32> to vector<256xf32>
    %17 = vector.shape_cast %16 : vector<256xf32> to vector<1x256xf32>
    %18 = math.log %17 : vector<1x256xf32>
    %19 = arith.addf %18, %5 : vector<1x256xf32>
    %20 = arith.subf %19, %12 : vector<1x256xf32>
    %c0_i32 = arith.constant 0 : i32
    %21 = vector.broadcast %c0_i32 : i32 to vector<1x256xi32>
    %22 = arith.cmpi sge, %3, %21 : vector<1x256xi32>
    %c0_i32_8 = arith.constant 0 : i32
    %23 = arith.cmpi eq, %arg1, %c0_i32_8 : i32
    %24 = arith.extui %23 : i1 to i32
    %c0_i32_9 = arith.constant 0 : i32
    %25 = arith.cmpi ne, %24, %c0_i32_9 : i32
    scf.if %25 {
      %cst_22 = arith.constant 0.000000e+00 : f32
      %42 = vector.broadcast %cst_22 : f32 to vector<2x256xf32>
      %c0_23 = arith.constant 0 : index
      %c0_24 = arith.constant 0 : index
      %c0_25 = arith.constant 0 : index
      %43 = vector.load %arg4[%c0_23, %c0_24, %c0_25] : memref<1x2x256xf32, #tpu.memory_space<vmem>>, vector<1x2x256xf32>
      %44 = vector.shape_cast %43 : vector<1x2x256xf32> to vector<2x256xf32>
      %45 = vector.shape_cast %42 : vector<2x256xf32> to vector<1x2x256xf32>
      tpu.vector_store %arg4[%c0_23, %c0_24, %c0_25], %45 {strides = array<i32>} : memref<1x2x256xf32, #tpu.memory_space<vmem>>, vector<1x2x256xf32>,
    } else {
    }
    %c0_10 = arith.constant 0 : index
    %c0_11 = arith.constant 0 : index
    %c0_12 = arith.constant 0 : index
    %26 = vector.load %arg4[%c0_10, %c0_11, %c0_12] : memref<1x2x256xf32, #tpu.memory_space<vmem>>, vector<1x1x256xf32>
    %27 = vector.shape_cast %26 : vector<1x1x256xf32> to vector<1x256xf32>
    %cst_13 = arith.constant 0.000000e+00 : f32
    %28 = vector.broadcast %cst_13 : f32 to vector<1x256xf32>
    %29 = arith.select %22, %20, %28 : vector<1x256xi1>, vector<1x256xf32>
    %30 = arith.addf %27, %29 : vector<1x256xf32>
    %c0_14 = arith.constant 0 : index
    %c0_15 = arith.constant 0 : index
    %c0_16 = arith.constant 0 : index
    %31 = vector.load %arg4[%c0_14, %c0_15, %c0_16] : memref<1x2x256xf32, #tpu.memory_space<vmem>>, vector<1x1x256xf32>
    %32 = vector.shape_cast %31 : vector<1x1x256xf32> to vector<1x256xf32>
    %33 = vector.shape_cast %30 : vector<1x256xf32> to vector<1x1x256xf32>
    tpu.vector_store %arg4[%c0_14, %c0_15, %c0_16], %33 {strides = array<i32>} : memref<1x2x256xf32, #tpu.memory_space<vmem>>, vector<1x1x256xf32>,
    %c0_17 = arith.constant 0 : index
    %c1 = arith.constant 1 : index
    %c0_18 = arith.constant 0 : index
    %34 = vector.load %arg4[%c0_17, %c1, %c0_18] : memref<1x2x256xf32, #tpu.memory_space<vmem>>, vector<1x1x256xf32>
    %35 = vector.shape_cast %34 : vector<1x1x256xf32> to vector<1x256xf32>
    %36 = arith.extui %22 : vector<1x256xi1> to vector<1x256xi32>
    %37 = arith.sitofp %36 : vector<1x256xi32> to vector<1x256xf32>
    %38 = arith.addf %35, %37 : vector<1x256xf32>
    %c0_19 = arith.constant 0 : index
    %c1_20 = arith.constant 1 : index
    %c0_21 = arith.constant 0 : index
    %39 = vector.load %arg4[%c0_19, %c1_20, %c0_21] : memref<1x2x256xf32, #tpu.memory_space<vmem>>, vector<1x1x256xf32>
    %40 = vector.shape_cast %39 : vector<1x1x256xf32> to vector<1x256xf32>
    %41 = vector.shape_cast %38 : vector<1x256xf32> to vector<1x1x256xf32>
    tpu.vector_store %arg4[%c0_19, %c1_20, %c0_21], %41 {strides = array<i32>} : memref<1x2x256xf32, #tpu.memory_space<vmem>>, vector<1x1x256xf32>,
    return
  }
  func.func @transform_0(%arg0: i32, %arg1: i32) -> (i32, i32, i32) {
    %c0_i32 = arith.constant 0 : i32
    %c0_i32_0 = arith.constant 0 : i32
    return %arg0, %c0_i32, %arg1 : i32, i32, i32
  }
  func.func @transform_1(%arg0: i32, %arg1: i32) -> (i32, i32, i32) {
    %c0_i32 = arith.constant 0 : i32
    %c0_i32_0 = arith.constant 0 : i32
    return %arg0, %c0_i32, %arg1 : i32, i32, i32
  }
  func.func @transform_2(%arg0: i32, %arg1: i32) -> (i32, i32, i32) {
    %c0_i32 = arith.constant 0 : i32
    %c0_i32_0 = arith.constant 0 : i32
    %c0_i32_1 = arith.constant 0 : i32
    return %arg0, %c0_i32, %c0_i32_0 : i32, i32, i32
  }
}

</mosaic_0001>

<llo_original>
// kernel: tpu_custom_call.1
$region0: #{tpu_custom_call.1}
  #allocation0 [shape = 'u32[]', space=smem, size = 0x4, offset = 0x4, fixed_abs, tag = 'smem constant byte address 0x4 - core index']
  #allocation1 [shape = 'u32[144,128]{1,0:T(1,128)}', space=vmem, size = 0x12000, scoped, tag = 'internal scratch']
  %s0 = inlined_call_operand.hbm [shape: f32[2,4,256], index: 0, kind: input, shape index: {}]
  %s1 = inlined_call_operand.hbm [shape: s32[2,1,256], index: 1, kind: input, shape index: {}]
  %s2 = inlined_call_operand.hbm [shape: f32[2,2,256], index: 2, kind: output, shape index: {}]
  %s3 = sld [smem:[#allocation0]]
  $region53: #{tpu_custom_call.1} parent=0
    _
  %s5 = ssub.s32 1, %s3
  %s6 = scalar_select 0, %s5, %s3
  $region1: #{tpu_custom_call.1} parent=0
    #allocation2 [shape = 'u8[8192]{0}', space=vmem, size = 0x2000, scoped, tag = 'input window, operand 0']
    #allocation3 [shape = 's32[2]{0}', space=sflag, size = 0x8, scoped, tag = 'scoped memory for tpu_custom_call.1']
    #allocation4 [shape = 's32[2]{0}', space=sflag, size = 0x8, scoped, tag = 'scoped memory for tpu_custom_call.1']
    #allocation5 [shape = 'u8[2048]{0}', space=vmem, size = 0x800, scoped, tag = 'input window, operand 1']
    #allocation6 [shape = 's32[2]{0}', space=sflag, size = 0x8, scoped, tag = 'scoped memory for tpu_custom_call.1']
    #allocation7 [shape = 'u8[4096]{0}', space=vmem, size = 0x1000, scoped, tag = 'output window, operand 0']
    %7 = vsyncpa [#allocation3], 0
    %s8 = scalar_lea.sflag [#allocation3], 1
    %9 = vsyncpa %s8, 0
    %10 = vsyncpa [#allocation6], 0
    %s11 = scalar_lea.sflag [#allocation6], 1
    %12 = vsyncpa %s11, 0
    %13 = vsyncpa [#allocation4], 0
    %s14 = scalar_lea.sflag [#allocation4], 1
    %15 = vsyncpa %s14, 0
    loop: start=0, step=1, limit=4
    $region2: #{tpu_custom_call.1} parent=1 // loop_pre_header
      _
    $region3: #{tpu_custom_call.1} parent=1 // loop_header
      %s17 = sphi 0, %s21
      %p18 = scmp.ge.s32.totalorder %s17, 4
      %s24 = sphi 0, %s36
      %s25 = sphi 0, %s32
      %s26 = sphi 0, %s24
      %s27 = sphi 0, %s25
      %s28 = sphi 0, %s26
      %s29 = sphi 0, %s27
      %s41 = sphi 0, %s43
      %s44 = sphi 0, %s41
      %s45 = sphi 0, %s44
      %s61 = sphi 0, %s45
      %s69 = sphi 0, %s71
      %s72 = sphi 0, %s69
      %s73 = sphi 0, %s72
      %s89 = sphi 0, %s73
      %s95 = sphi 0, %s97
      %s98 = sphi 0, %s95
      %s99 = sphi 0, %s98
      %s115 = sphi 0, %s99
    $region4: #{tpu_custom_call.1} parent=1 // loop_header_branch
      %20 = sbr.rel (%p18) target = $region8
    $region5: #{tpu_custom_call.1} parent=1 // loop_body
      %s22 = ssub.s32 %s17, 1
      %s23 = ssub.s32 %s17, 2
      %s30 = sadd.s32 1, %s25
      %p31 = scmp.ge.s32.totalorder %s30, 1
      %s32 = scalar_select %p31, 0, %s30
      %s33 = sadd.s32 1, %s24
      %s34 = scalar_select %p31, %s33, %s24
      %p35 = scmp.ge.s32.totalorder %s34, 2
      %s36 = scalar_select %p35, 0, %s34
      %s37 = ssub.s32 %s24, %s36
      %s38 = ssub.s32 %s25, %s32
      %s39 = sor.u32 %s37, %s38
      %p40 = scmp.eq.s32.totalorder %s39, 0
      %s42 = sadd.s32 %s41, 1
      %s43 = scalar_select %p40, %s41, %s42
      %p46 = pneg %p40
      %p47 = scmp.eq.s32.totalorder %s17, 1
      %p48 = por %p46, %p47
      %p49 = scmp.ne.s32.totalorder %s41, %s44
      %p50 = scmp.eq.s32.totalorder %s17, 0
      %p51 = por %p49, %p50
      %p52 = scmp.ne.s32.totalorder %s41, %s44
      %p53 = scmp.eq.s32.totalorder %s22, 1
      %p54 = por %p52, %p53
      %p55 = scmp.ne.s32.totalorder %s44, %s45
      %p56 = scmp.eq.s32.totalorder %s22, 0
      %p57 = por %p55, %p56
      %p58 = scmp.ne.s32.totalorder %s44, %s45
      %p59 = scmp.eq.s32.totalorder %s23, 1
      %p60 = por %p58, %p59
      %p62 = scmp.ne.s32.totalorder %s45, %s61
      %p63 = scmp.eq.s32.totalorder %s23, 0
      %p64 = por %p62, %p63
      %s65 = ssub.s32 %s24, %s36
      %s66 = ssub.s32 %s25, %s32
      %s67 = sor.u32 %s65, %s66
      %p68 = scmp.eq.s32.totalorder %s67, 0
      %s70 = sadd.s32 %s69, 1
      %s71 = scalar_select %p68, %s69, %s70
      %p74 = pneg %p68
      %p75 = scmp.eq.s32.totalorder %s17, 1
      %p76 = por %p74, %p75
      %p77 = scmp.ne.s32.totalorder %s69, %s72
      %p78 = scmp.eq.s32.totalorder %s17, 0
      %p79 = por %p77, %p78
      %p80 = scmp.ne.s32.totalorder %s69, %s72
      %p81 = scmp.eq.s32.totalorder %s22, 1
      %p82 = por %p80, %p81
      %p83 = scmp.ne.s32.totalorder %s72, %s73
      %p84 = scmp.eq.s32.totalorder %s22, 0
      %p85 = por %p83, %p84
      %p86 = scmp.ne.s32.totalorder %s72, %s73
      %p87 = scmp.eq.s32.totalorder %s23, 1
      %p88 = por %p86, %p87
      %p90 = scmp.ne.s32.totalorder %s73, %s89
      %p91 = scmp.eq.s32.totalorder %s23, 0
      %p92 = por %p90, %p91
      %s93 = ssub.s32 %s24, %s36
      %p94 = scmp.eq.s32.totalorder %s93, 0
      %s96 = sadd.s32 %s95, 1
      %s97 = scalar_select %p94, %s95, %s96
      %p100 = pneg %p94
      %p101 = scmp.eq.s32.totalorder %s17, 1
      %p102 = por %p100, %p101
      %p103 = scmp.ne.s32.totalorder %s95, %s98
      %p104 = scmp.eq.s32.totalorder %s17, 0
      %p105 = por %p103, %p104
      %p106 = scmp.ne.s32.totalorder %s95, %s98
      %p107 = scmp.eq.s32.totalorder %s22, 1
      %p108 = por %p106, %p107
      %p109 = scmp.ne.s32.totalorder %s98, %s99
      %p110 = scmp.eq.s32.totalorder %s22, 0
      %p111 = por %p109, %p110
      %p112 = scmp.ne.s32.totalorder %s98, %s99
      %p113 = scmp.eq.s32.totalorder %s23, 1
      %p114 = por %p112, %p113
      %p116 = scmp.ne.s32.totalorder %s99, %s115
      %p117 = scmp.eq.s32.totalorder %s23, 0
      %p118 = por %p116, %p117
      %p119 = scmp.le.s32.totalorder 1, %s17
      %p120 = scmp.lt.s32.totalorder %s17, 3
      %p121 = pnand %p119, %p120
      %p122 = pneg %p121
      // Predicated region
      $region9: #{tpu_custom_call.1} parent=5 // pred_check
        _
      $region10: #{tpu_custom_call.1} parent=5 // pred_check_branch
        %124 = sbr.rel (%p121) target = $region12
      $region11: #{tpu_custom_call.1} parent=5 // pred_region
        %s125 = ssub.s32 %s17, 1
      $region12: #{tpu_custom_call.1} parent=5 // pred_fallthru
        _
      %p126 = scmp.lt.s32.totalorder %s17, 2
      // Predicated region
      $region13: #{tpu_custom_call.1} parent=5 // pred_check
        %p127 = pneg %p126
      $region14: #{tpu_custom_call.1} parent=5 // pred_check_branch
        %129 = sbr.rel (%p127) target = $region16
      $region15: #{tpu_custom_call.1} parent=5 // pred_region
        // Predicated region
        $region17: #{tpu_custom_call.1} parent=15 // pred_check
          %p130 = pneg %p51
        $region18: #{tpu_custom_call.1} parent=15 // pred_check_branch
          %132 = sbr.rel (%p130) target = $region20
        $region19: #{tpu_custom_call.1} parent=15 // pred_region
          %s133 = sand.u32 %s41, 1
          %s134 = scalar_lea.sflag [#allocation3], %s133
          %s135 = sand.u32 %s41, 1
          %s136 = smul.addr %s135, 8
          %s137 = scalar_lea.vmem [#allocation2], %s136
          %s138 = smul.u32 2, %s25
          %s140 = ssub.s32 128, 128
          %141 = vsyncadd %s134, %s140
          %s142 = smul.addr %s24, 2
          %s143 = sadd.s32 %s138, %s142
          %s144 = smul.addr %s143, 64
          %s145 = scalar_lea.hbm %s0, %s144
          %s147 = sshll.u32 %s137, 4
          %s148 = int_to_ptr.vmem [resolvable:$true] %s147
          %150 = dma.hbm_to_vmem [thread:$0]  %s145, 128, %s148, %s134
        $region20: #{tpu_custom_call.1} parent=15 // pred_fallthru
          _
        // Predicated region
        $region21: #{tpu_custom_call.1} parent=15 // pred_check
          %p151 = pneg %p79
        $region22: #{tpu_custom_call.1} parent=15 // pred_check_branch
          %153 = sbr.rel (%p151) target = $region24
        $region23: #{tpu_custom_call.1} parent=15 // pred_region
          %s154 = sand.u32 %s69, 1
          %s155 = scalar_lea.sflag [#allocation6], %s154
          %s156 = sand.u32 %s69, 1
          %s157 = smul.addr %s156, 2
          %s158 = scalar_lea.vmem [#allocation5], %s157
          %s159 = smul.u32 2, %s25
          %s161 = ssub.s32 32, 32
          %162 = vsyncadd %s155, %s161
          %s163 = smul.addr %s24, 2
          %s164 = sadd.s32 %s159, %s163
          %s165 = smul.addr %s164, 16
          %s166 = scalar_lea.hbm %s1, %s165
          %s168 = sshll.u32 %s158, 4
          %s169 = int_to_ptr.vmem [resolvable:$true] %s168
          %171 = dma.hbm_to_vmem [thread:$0]  %s166, 32, %s169, %s155
        $region24: #{tpu_custom_call.1} parent=15 // pred_fallthru
          _
      $region16: #{tpu_custom_call.1} parent=5 // pred_fallthru
        _
      %p172 = scmp.le.s32.totalorder 1, %s17
      %p173 = scmp.lt.s32.totalorder %s17, 3
      %p174 = pnand %p172, %p173
      %p175 = pneg %p174
      // Predicated region
      $region25: #{tpu_custom_call.1} parent=5 // pred_check
        _
      $region26: #{tpu_custom_call.1} parent=5 // pred_check_branch
        %177 = sbr.rel (%p174) target = $region28
      $region27: #{tpu_custom_call.1} parent=5 // pred_region
        %s178 = ssub.s32 %s17, 1
        %s179 = sand.u32 %s44, 1
        %s180 = scalar_lea.sflag [#allocation3], %s179
        %s181 = sand.u32 %s44, 1
        %s182 = smul.addr %s181, 8
        %s183 = scalar_lea.vmem [#allocation2], %s182
        // Predicated region
        $region29: #{tpu_custom_call.1} parent=27 // pred_check
          %p184 = pneg %p57
        $region30: #{tpu_custom_call.1} parent=27 // pred_check_branch
          %186 = sbr.rel (%p184) target = $region32
        $region31: #{tpu_custom_call.1} parent=27 // pred_region
          %187 = dma.done %s180, 128
        $region32: #{tpu_custom_call.1} parent=27 // pred_fallthru
          _
        %s188 = sand.u32 %s72, 1
        %s189 = scalar_lea.sflag [#allocation6], %s188
        %s190 = sand.u32 %s72, 1
        %s191 = smul.addr %s190, 2
        %s192 = scalar_lea.vmem [#allocation5], %s191
        // Predicated region
        $region33: #{tpu_custom_call.1} parent=27 // pred_check
          %p193 = pneg %p85
        $region34: #{tpu_custom_call.1} parent=27 // pred_check_branch
          %195 = sbr.rel (%p193) target = $region36
        $region35: #{tpu_custom_call.1} parent=27 // pred_region
          %196 = dma.done %s189, 32
        $region36: #{tpu_custom_call.1} parent=27 // pred_fallthru
          _
        %s197 = sand.u32 %s44, 1
        %s198 = scalar_lea.sflag [#allocation3], %s197
        %s199 = sand.u32 %s44, 1
        %s200 = smul.addr %s199, 8
        %s201 = scalar_lea.vmem [#allocation2], %s200
        %p202 = pneg %p57
        %p203 = pneg %p54
        %s204 = sand.u32 %s72, 1
        %s205 = scalar_lea.sflag [#allocation6], %s204
        %s206 = sand.u32 %s72, 1
        %s207 = smul.addr %s206, 2
        %s208 = scalar_lea.vmem [#allocation5], %s207
        %p209 = pneg %p85
        %p210 = pneg %p82
        %p211 = pneg %p111
        %p212 = pneg %p108
        %s213 = sand.u32 %s98, 1
        %s214 = scalar_lea.sflag [#allocation4], %s213
        %s215 = sand.u32 %s98, 1
        %s216 = smul.addr %s215, 4
        %s217 = scalar_lea.vmem [#allocation7], %s216
        %s218 = smul.u32 2, %s27
        %s219 = smul.u32 2, %s27
        %v220 = vld [vmem:[%s183] sm:$0xff]
        %v221 = vld [vmem:[%s192] sm:$0x3]
        %v223 = vcombine.high %v220, %v220
        %vm225 = vcmask 1043456
        %v226 = vsel %vm225, %v220, -inf
        %v227 = vrot.slane %v226, 4
        %v228 = vmax.f32 %v226, %v227
        %v229 = vrot.slane %v228, 2
        %v230 = vmax.f32 %v228, %v229
        %v231 = vrot.slane %v230, 1
        %v232 = vmax.f32 %v230, %v231
        %v233 = vsel %vm225, %v223, -inf
        %v234 = vrot.slane %v233, 4
        %v235 = vmax.f32 %v233, %v234
        %v236 = vrot.slane %v235, 2
        %v237 = vmax.f32 %v235, %v236
        %v238 = vrot.slane %v237, 1
        %v239 = vmax.f32 %v237, %v238
        %v240 = vlaneseq
        %v241 = vshrl.u32 %v240, 7
        %v242 = vlaneseq
        %v243 = vshrl.u32 %v242, 7
        %v244 = vsub.s32 0, %v243
        %v245 = vrot.slane %v221, %v244
        %v246 = vlaneseq
        %v247 = vshrl.u32 %v246, 7
        %v248 = vsub.s32 1, %v247
        %v249 = vrot.slane %v221, %v248
        %vm250 = vcmp.eq.s32.totalorder %v241, %v245
        %vm251 = vcmp.eq.s32.totalorder %v241, %v249
        %v252 = vsel %vm250, %v220, 0.0
        %v253 = vsel %vm251, %v223, 0.0
        %v254 = vsel %vm225, %v252, 0.0
        %v255 = vrot.slane %v254, 4
        %v256 = vadd.f32 %v254, %v255
        %v257 = vrot.slane %v256, 2
        %v258 = vadd.f32 %v256, %v257
        %v259 = vrot.slane %v258, 1
        %v260 = vadd.f32 %v258, %v259
        %v261 = vsel %vm225, %v253, 0.0
        %v262 = vrot.slane %v261, 4
        %v263 = vadd.f32 %v261, %v262
        %v264 = vrot.slane %v263, 2
        %v265 = vadd.f32 %v263, %v264
        %v266 = vrot.slane %v265, 1
        %v267 = vadd.f32 %v265, %v266
        %v270 = vcombine.low %v232, %v239
        %v272 = vsub.f32 %v220, %v270
        %v273 = vmul.f32 %v272, 1.442695
        %v274 = vpow.pop %v273
        %v276 = vcombine.high %v274, %v274
        %v278 = vsel %vm225, %v274, 0.0
        %v279 = vrot.slane %v278, 4
        %v280 = vadd.f32 %v278, %v279
        %v281 = vrot.slane %v280, 2
        %v282 = vadd.f32 %v280, %v281
        %v283 = vrot.slane %v282, 1
        %v284 = vadd.f32 %v282, %v283
        %v285 = vsel %vm225, %v276, 0.0
        %v286 = vrot.slane %v285, 4
        %v287 = vadd.f32 %v285, %v286
        %v288 = vrot.slane %v287, 2
        %v289 = vadd.f32 %v287, %v288
        %v290 = vrot.slane %v289, 1
        %v291 = vadd.f32 %v289, %v290
        %v292 = vlog2.pop %v284
        %v293 = vmul.f32 %v292, 0.6931472
        %v294 = vlog2.pop %v291
        %v295 = vmul.f32 %v294, 0.6931472
        %v296 = vadd.f32 %v293, %v232
        %v297 = vadd.f32 %v295, %v239
        %v298 = vsub.f32 %v296, %v260
        %v299 = vsub.f32 %v297, %v267
        %vm300 = vcmp.ge.s32.totalorder %v221, 0
        %p301 = scmp.eq.s32.totalorder %s27, 0
        // Predicated region
        $region37: #{tpu_custom_call.1} parent=27 // pred_check
          %p302 = pneg %p301
        $region38: #{tpu_custom_call.1} parent=27 // pred_check_branch
          %304 = sbr.rel (%p302) target = $region40
        $region39: #{tpu_custom_call.1} parent=27 // pred_region
          %305 = vst [vmem:[%s217] sm:$0xf] 0.0
        $region40: #{tpu_custom_call.1} parent=27 // pred_fallthru
          _
        %v306 = vld [vmem:[%s217] ss:$2 sm:$0x3]
        %v309 = vcombine.low %v298, %v299
        %v311 = vunpack.c.l.s4 1966171168
        %v312 = vunpack.c.0.s8 %v311
        %v313 = vlaneseq
        %v314 = vshrl.u32 %v313, 7
        %v315 = vsub.s32 %v312, %v314
        %v316 = vrot.slane %v309, %v315
        %v318 = vunpack.c.l.s4 1966171168
        %v319 = vunpack.c.0.s8 %v318
        %v320 = vlaneseq
        %v321 = vshrl.u32 %v320, 7
        %v322 = vsub.s32 %v319, %v321
        %v323 = vrot.slane %v316, %v322
        %v325 = vsel %vm300, %v323, 0.0
        %v326 = vadd.f32 %v306, %v325
        %v327 = vlaneseq
        %vm328 = vcmp.ge.s32.totalorder %v327, 0
        %vm329 = vcmp.lt.s32.totalorder %v327, 256
        %vm330 = vmand %vm328, %vm329
        %331 = vst.msk [vmem:[%s217] ss:$2 sm:$0x3] %vm330, %v326
        %s332 = scalar_lea.vmem %s217, 1 [#allocation7]
        %v333 = vld [vmem:[%s332] ss:$2 sm:$0x3]
        %v334 = vsel %vm300, 1, 0
        %v335 = vcvt.s32.f32 %v334
        %v336 = vadd.f32 %v333, %v335
        %337 = vst.msk [vmem:[%s332] ss:$2 sm:$0x3] %vm330, %v336
        %s338 = sand.u32 %s98, 1
        %s339 = scalar_lea.sflag [#allocation4], %s338
        %s340 = sand.u32 %s98, 1
        %s341 = smul.addr %s340, 4
        %s342 = scalar_lea.vmem [#allocation7], %s341
        // Predicated region
        $region41: #{tpu_custom_call.1} parent=27 // pred_check
          %p343 = pneg %p108
        $region42: #{tpu_custom_call.1} parent=27 // pred_check_branch
          %345 = sbr.rel (%p343) target = $region44
        $region43: #{tpu_custom_call.1} parent=27 // pred_region
          %s347 = ssub.s32 64, 64
          %348 = vsyncadd %s339, %s347
          %s349 = smul.addr %s26, 2
          %s350 = smul.addr %s349, 32
          %s351 = scalar_lea.hbm %s2, %s350
          %s353 = sshll.u32 %s342, 4
          %s354 = int_to_ptr.vmem [resolvable:$true] %s353
          %356 = dma.vmem_to_hbm [thread:$0]  %s354, 64, %s351, %s339
        $region44: #{tpu_custom_call.1} parent=27 // pred_fallthru
          _
      $region28: #{tpu_custom_call.1} parent=5 // pred_fallthru
        _
      %p357 = scmp.le.s32.totalorder 2, %s17
      // Predicated region
      $region45: #{tpu_custom_call.1} parent=5 // pred_check
        %p358 = pneg %p357
      $region46: #{tpu_custom_call.1} parent=5 // pred_check_branch
        %360 = sbr.rel (%p358) target = $region48
      $region47: #{tpu_custom_call.1} parent=5 // pred_region
        %s361 = ssub.s32 %s17, 2
        // Predicated region
        $region49: #{tpu_custom_call.1} parent=47 // pred_check
          %p362 = pneg %p114
        $region50: #{tpu_custom_call.1} parent=47 // pred_check_branch
          %364 = sbr.rel (%p362) target = $region52
        $region51: #{tpu_custom_call.1} parent=47 // pred_region
          %s365 = sand.u32 %s99, 1
          %s366 = scalar_lea.sflag [#allocation4], %s365
          %s367 = sand.u32 %s99, 1
          %s368 = smul.addr %s367, 4
          %s369 = scalar_lea.vmem [#allocation7], %s368
          %370 = dma.done %s366, 64
        $region52: #{tpu_custom_call.1} parent=47 // pred_fallthru
          _
      $region48: #{tpu_custom_call.1} parent=5 // pred_fallthru
        _
    $region6: #{tpu_custom_call.1} parent=1 // loop_footer
      %s21 = sadd.s32 1, %s17
    $region7: #{tpu_custom_call.1} parent=1 // loop_footer_branch
      %16 = sbr.rel target = $region3
    $region8: #{tpu_custom_call.1} parent=1 // loop_exit
      _
    %371 = vsyncpa [#allocation3], 1
    %s372 = scalar_lea.sflag [#allocation3], 1
    %373 = vsyncpa %s372, 1
    %374 = vsyncpa [#allocation6], 1
    %s375 = scalar_lea.sflag [#allocation6], 1
    %376 = vsyncpa %s375, 1
    %377 = vsyncpa [#allocation4], 1
    %s378 = scalar_lea.sflag [#allocation4], 1
    %379 = vsyncpa %s378, 1

</llo_original>
